<compile_context>
chip_gen: v7x
topology: tpu7x:2x2x1
jax: 0.10.0
libtpu: 0.0.40
codegen_flags: <defaults>
</compile_context>

<pallas_src>
import functools

import jax
import jax.numpy as jnp
from jax import lax
from jax.experimental import pallas as pl
from jax.experimental.pallas import tpu as pltpu


def ca_kernel(x_ref, w1t_ref, w2t_ref, wsa_ref, wsb_ref, bias_ref, o_ref,
              sum_acc, max_acc, *, hw, tile, full_chunks_last, partial_len):
    """x_ref: (1, C, tile) slab of the current batch item.
    w1t: (C, Cr); w2t: (Cr, C); wsa/wsb: (C, C) with BN scale folded into columns;
    bias: (1, C). o_ref: (1, 1, C); sum_acc/max_acc: (1, C, 128) VMEM scratch."""
    k = pl.program_id(1)
    n_steps = pl.num_programs(1)

    @pl.when(k == 0)
    def _init():
        sum_acc[...] = jnp.zeros_like(sum_acc)
        max_acc[...] = jnp.full_like(max_acc, -jnp.inf)

    n_chunks = tile // 128

    def accumulate(num_chunks, do_partial):
        s = sum_acc[...]
        m = max_acc[...]
        if num_chunks > 0:
            def body(j, carry):
                cs, cm = carry
                off = pl.multiple_of(j * 128, 128)
                chunk = x_ref[:, :, pl.ds(off, 128)].astype(jnp.float32)
                return cs + chunk, jnp.maximum(cm, chunk)

            s, m = lax.fori_loop(0, num_chunks, body, (s, m),
                                 unroll=min(8, num_chunks))
        if do_partial:
            # Single statically-placed partial 128-lane chunk; mask against true hw
            # (OOB lanes of this slab hold unspecified data -> must never be read
            # into sum/max unmasked).
            off = num_chunks * 128
            chunk = x_ref[:, :, off:off + 128].astype(jnp.float32)
            lane = lax.broadcasted_iota(jnp.int32, chunk.shape, 2)
            valid = lane < partial_len
            s = s + jnp.where(valid, chunk, 0.0)
            m = jnp.maximum(m, jnp.where(valid, chunk, -jnp.inf))
        return s, m

    is_last = k == n_steps - 1

    @pl.when(jnp.logical_not(is_last))
    def _body_full():
        s, m = accumulate(n_chunks, False)
        sum_acc[...] = s
        max_acc[...] = m

    @pl.when(is_last)
    def _body_last():
        s, m = accumulate(full_chunks_last, partial_len > 0)

        # Single cross-lane (XLU) reduce of the 128-wide lane-resident partials.
        avg = jnp.sum(s, axis=-1) * (1.0 / float(hw))          # (1, C)
        mx = jnp.max(m, axis=-1)                                # (1, C)

        # Shared MLP on both pooled rows at once: one dot per layer.
        pooled = jnp.concatenate([avg, mx], axis=0)             # (2, C)
        hdn = jnp.maximum(
            jnp.dot(pooled, w1t_ref[...], preferred_element_type=jnp.float32),
            0.0)                                                # (2, Cr)
        both = jnp.dot(hdn, w2t_ref[...],
                       preferred_element_type=jnp.float32)      # (2, C)
        avg_out = both[0:1, :]
        max_out = both[1:2, :]

        # selectattention conv1x1 over cat([avg_out, max_out], dim=1): pre-split
        # and BN-scale-folded in the wrapper -> two small matmuls + bias.
        sel = (jnp.dot(avg_out, wsa_ref[...], preferred_element_type=jnp.float32)
               + jnp.dot(max_out, wsb_ref[...], preferred_element_type=jnp.float32))
        o_ref[...] = jax.nn.sigmoid(sel + bias_ref[...])[:, None, :].astype(o_ref.dtype)


def ca_forward(x, params, slab_bytes=4 << 20):
    """x: (N, C, H, W) float (NCHW, like PyTorch). Returns (N, C, 1, 1) float32.

    slab_bytes: target size of one streamed (1, C, tile) input slab; the runtime
    double-buffers it, so VMEM usage for x is ~2*slab_bytes."""
    n, c, h, w = x.shape
    w1, w2, wsel, gamma, beta, running_mean, running_var, eps = params
    cr = w1.shape[0]

    # Fold BN running stats: scale folded into selectattention weight columns,
    # bias kept as an additive (1, C) vector.  Plain-JAX layout plumbing.
    inv_std = gamma / jnp.sqrt(running_var + eps)
    bias = (beta - running_mean * inv_std).reshape(1, c)
    w1_t = jnp.transpose(w1)                                   # (C, Cr)
    w2_t = jnp.transpose(w2)                                   # (Cr, C)
    wsa_t = jnp.transpose(wsel[:, :c]) * inv_std[None, :]      # (C, C) for avg_out
    wsb_t = jnp.transpose(wsel[:, c:]) * inv_std[None, :]      # (C, C) for max_out

    hw = h * w
    x3 = x.reshape(n, c, hw)
    if hw < 128:                       # tiny feature maps: pad to one lane group
        x3 = jnp.pad(x3, ((0, 0), (0, 0), (0, 128 - hw)))
        hw_padded = 128
    else:
        hw_padded = hw

    itemsize = jnp.dtype(x3.dtype).itemsize
    hw_ceil = pl.cdiv(hw_padded, 128) * 128
    # Lane-dense tile (multiple of 128) sized from the slab budget.
    tile_budget = max(128, (int(slab_bytes) // (c * itemsize) // 128) * 128)
    tile = min(hw_ceil, tile_budget)

    grid_hw = pl.cdiv(hw_padded, tile)
    # Static split of the last slab: fully-valid chunks + one partial chunk length,
    # measured against the TRUE hw (padded / OOB lanes are masked out).
    rem = hw - (grid_hw - 1) * tile
    full_chunks_last = rem // 128
    partial_len = rem % 128

    # Scoped VMEM: 2x input slab (double-buffer) + 2x-buffered resident weights +
    # lane-resident accumulators + headroom.  Clamp well under v7x's 64 MiB.
    need = (2 * c * tile * itemsize
            + 2 * 4 * (c * cr + cr * c + 2 * c * c + c)
            + 2 * c * 128 * 4
            + (4 << 20))
    vmem_limit = int(min(max(need, 16 << 20), 48 << 20))

    kernel = functools.partial(ca_kernel, hw=hw, tile=tile,
                               full_chunks_last=full_chunks_last,
                               partial_len=partial_len)

    out = pl.pallas_call(
        kernel,
        out_shape=jax.ShapeDtypeStruct((n, 1, c), jnp.float32),
        grid=(n, grid_hw),
        in_specs=[
            pl.BlockSpec((1, c, tile), lambda i, k: (i, 0, k)),   # streamed x slab
            pl.BlockSpec((c, cr), lambda i, k: (0, 0)),           # w1_t (resident)
            pl.BlockSpec((cr, c), lambda i, k: (0, 0)),           # w2_t
            pl.BlockSpec((c, c), lambda i, k: (0, 0)),            # wsa_t * bn_scale
            pl.BlockSpec((c, c), lambda i, k: (0, 0)),            # wsb_t * bn_scale
            pl.BlockSpec((1, c), lambda i, k: (0, 0)),            # bn bias
        ],
        out_specs=pl.BlockSpec((1, 1, c), lambda i, k: (i, 0, 0)),
        scratch_shapes=[
            pltpu.VMEM((1, c, 128), jnp.float32),   # running sum (lane-resident)
            pltpu.VMEM((1, c, 128), jnp.float32),   # running max (lane-resident)
        ],
        compiler_params=pltpu.CompilerParams(
            dimension_semantics=("parallel", "arbitrary"),
            vmem_limit_bytes=vmem_limit,
        ),
    )(x3, w1_t, w2_t, wsa_t, wsb_t, bias)

    return out.reshape(n, c, 1, 1)


def ca_reference(x, params):
    """Pure-JAX reference of the same forward pass (for verification)."""
    n, c, h, w = x.shape
    w1, w2, wsel, gamma, beta, running_mean, running_var, eps = params
    xf = x.astype(jnp.float32)
    avg = jnp.mean(xf, axis=(2, 3))                      # (N, C)
    mx = jnp.max(xf, axis=(2, 3))                        # (N, C)

    def mlp(v):
        return jnp.maximum(v @ w1.T, 0.0) @ w2.T

    cat = jnp.concatenate([mlp(avg), mlp(mx)], axis=-1)  # (N, 2C)
    sel = cat @ wsel.T                                   # (N, C)
    bn = (sel - running_mean) / jnp.sqrt(running_var + eps) * gamma + beta
    return jax.nn.sigmoid(bn).reshape(n, c, 1, 1)


def make_params(key, in_planes, ratio=16):
    """Deterministic parameter init matching the module's __init__ shapes.
    Note: fc2 input channels are in_planes // 16 (hard-coded in the module),
    which matches in_planes // ratio only for the default ratio=16."""
    cr = in_planes // ratio
    k1, k2, k3, k4, k5, k6, k7 = jax.random.split(key, 7)
    w1 = jax.random.normal(k1, (cr, in_planes), jnp.float32) * 0.1               # fc1 conv1x1
    w2 = jax.random.normal(k2, (in_planes, in_planes // 16), jnp.float32) * 0.1  # fc2 conv1x1
    wsel = jax.random.normal(k3, (in_planes, 2 * in_planes), jnp.float32) * 0.1  # selectattention conv1x1
    gamma = 1.0 + 0.1 * jax.random.normal(k4, (in_planes,), jnp.float32)          # BN weight
    beta = 0.1 * jax.random.normal(k5, (in_planes,), jnp.float32)                 # BN bias
    running_mean = 0.05 * jax.random.normal(k6, (in_planes,), jnp.float32)
    running_var = 1.0 + 0.1 * jax.random.uniform(k7, (in_planes,), jnp.float32)
    eps = jnp.float32(1e-5)
    return (w1, w2, wsel, gamma, beta, running_mean, running_var, eps)


def _check(out, ref, tag, atol, rtol):
    err = float(jnp.max(jnp.abs(out - ref)))
    assert jnp.allclose(out, ref, atol=atol, rtol=rtol), (tag, err)


if __name__ == "__main__":
    key = jax.random.PRNGKey(0)
    k_x, k_p = jax.random.split(key)

    N, C = 2, 32                       # in_planes=32, ratio=16 -> hidden=2
    params = make_params(k_p, in_planes=C, ratio=16)

    # Case 1: H*W multiple of 128 (no masking), grid = (N, 1).
    x1 = jax.random.normal(k_x, (N, C, 16, 16), jnp.float32)
    out1 = jax.block_until_ready(ca_forward(x1, params))
    _check(out1, ca_reference(x1, params), "case1", 1e-4, 1e-4)
    assert out1.shape == (N, C, 1, 1), out1.shape

    # Case 2: H*W = 400 (masked partial tail chunk), single slab.
    x2 = jax.random.normal(jax.random.fold_in(k_x, 1), (N, C, 20, 20), jnp.float32)
    out2 = jax.block_until_ready(ca_forward(x2, params))
    _check(out2, ca_reference(x2, params), "case2", 1e-4, 1e-4)

    # Case 3: multi-step accumulation over the HW grid axis (forced small slab).
    x3 = jax.random.normal(jax.random.fold_in(k_x, 2), (N, C, 32, 32), jnp.float32)
    out3 = jax.block_until_ready(ca_forward(x3, params, slab_bytes=32 << 10))
    _check(out3, ca_reference(x3, params), "case3", 1e-4, 1e-4)

    # Case 4: multi-step AND a partial masked chunk on the last slab.
    x4 = jax.random.normal(jax.random.fold_in(k_x, 3), (N, C, 20, 20), jnp.float32)
    out4 = jax.block_until_ready(ca_forward(x4, params, slab_bytes=16 << 10))
    _check(out4, ca_reference(x4, params), "case4", 1e-4, 1e-4)

    # Case 5: H*W < 128 (padded to one lane group, fully masked tail).
    x5 = jax.random.normal(jax.random.fold_in(k_x, 4), (N, C, 8, 8), jnp.float32)
    out5 = jax.block_until_ready(ca_forward(x5, params))
    _check(out5, ca_reference(x5, params), "case5", 1e-4, 1e-4)

    # Case 6: bf16 streaming (halves HBM traffic; kernel upcasts per chunk).
    x6 = jax.random.normal(jax.random.fold_in(k_x, 5), (N, C, 16, 16),
                           jnp.float32).astype(jnp.bfloat16)
    out6 = jax.block_until_ready(ca_forward(x6, params))
    _check(out6, ca_reference(x6, params), "case6", 5e-3, 5e-3)

    print("KERNEL_OK")
</pallas_src>

<mosaic_0001>
module attributes {stable_mosaic.version = 11 : i64} {
  func.func @ca_kernel(%arg0: i32, %arg1: i32, %arg2: memref<1x32x256xf32, #tpu.memory_space<vmem>>, %arg3: memref<32x2xf32, #tpu.memory_space<vmem>>, %arg4: memref<2x32xf32, #tpu.memory_space<vmem>>, %arg5: memref<32x32xf32, #tpu.memory_space<vmem>>, %arg6: memref<32x32xf32, #tpu.memory_space<vmem>>, %arg7: memref<1x32xf32, #tpu.memory_space<vmem>>, %arg8: memref<1x1x32xf32, #tpu.memory_space<vmem>>, %arg9: memref<1x32x128xf32, #tpu.memory_space<vmem>>, %arg10: memref<1x32x128xf32, #tpu.memory_space<vmem>>) attributes {dimension_semantics = [#tpu.dimension_semantics<parallel>, #tpu.dimension_semantics<arbitrary>], iteration_bounds = array<i64: 2, 1>, scalar_prefetch = 0 : i64, scratch_operands = 2 : i64, tpu.core_type = #tpu.core_type<tc>, window_params = [{transform_indices = @transform_0, window_bounds = array<i64: 1, 32, 256>}, {pipeline_mode = #tpu.pipeline_mode<synchronous>, transform_indices = @transform_1, window_bounds = array<i64: 32, 2>}, {pipeline_mode = #tpu.pipeline_mode<synchronous>, transform_indices = @transform_2, window_bounds = array<i64: 2, 32>}, {pipeline_mode = #tpu.pipeline_mode<synchronous>, transform_indices = @transform_3, window_bounds = array<i64: 32, 32>}, {pipeline_mode = #tpu.pipeline_mode<synchronous>, transform_indices = @transform_4, window_bounds = array<i64: 32, 32>}, {pipeline_mode = #tpu.pipeline_mode<synchronous>, transform_indices = @transform_5, window_bounds = array<i64: 1, 32>}, {transform_indices = @transform_6, window_bounds = array<i64: 1, 1, 32>}]} {
    %c0_i32 = arith.constant 0 : i32
    %0 = arith.cmpi eq, %arg1, %c0_i32 : i32
    %1 = arith.extui %0 : i1 to i32
    %c0_i32_0 = arith.constant 0 : i32
    %2 = arith.cmpi ne, %1, %c0_i32_0 : i32
    scf.if %2 {
      %cst = arith.constant 0.000000e+00 : f32
      %9 = vector.broadcast %cst : f32 to vector<1x32x128xf32>
      %c0 = arith.constant 0 : index
      %c0_4 = arith.constant 0 : index
      %c0_5 = arith.constant 0 : index
      %10 = vector.load %arg9[%c0, %c0_4, %c0_5] : memref<1x32x128xf32, #tpu.memory_space<vmem>>, vector<1x32x128xf32>
      tpu.vector_store %arg9[%c0, %c0_4, %c0_5], %9 {strides = array<i32>} : memref<1x32x128xf32, #tpu.memory_space<vmem>>, vector<1x32x128xf32>,
      %cst_6 = arith.constant 0xFF800000 : f32
      %11 = vector.broadcast %cst_6 : f32 to vector<1x32x128xf32>
      %c0_7 = arith.constant 0 : index
      %c0_8 = arith.constant 0 : index
      %c0_9 = arith.constant 0 : index
      %12 = vector.load %arg10[%c0_7, %c0_8, %c0_9] : memref<1x32x128xf32, #tpu.memory_space<vmem>>, vector<1x32x128xf32>
      tpu.vector_store %arg10[%c0_7, %c0_8, %c0_9], %11 {strides = array<i32>} : memref<1x32x128xf32, #tpu.memory_space<vmem>>, vector<1x32x128xf32>,
    } else {
    }
    %c0_i32_1 = arith.constant 0 : i32
    %3 = arith.cmpi eq, %arg1, %c0_i32_1 : i32
    %true = arith.constant true
    %4 = arith.xori %3, %true : i1
    %5 = arith.extui %4 : i1 to i32
    %c0_i32_2 = arith.constant 0 : i32
    %6 = arith.cmpi ne, %5, %c0_i32_2 : i32
    scf.if %6 {
      %c0 = arith.constant 0 : index
      %c0_4 = arith.constant 0 : index
      %c0_5 = arith.constant 0 : index
      %9 = vector.load %arg9[%c0, %c0_4, %c0_5] : memref<1x32x128xf32, #tpu.memory_space<vmem>>, vector<1x32x128xf32>
      %c0_6 = arith.constant 0 : index
      %c0_7 = arith.constant 0 : index
      %c0_8 = arith.constant 0 : index
      %10 = vector.load %arg10[%c0_6, %c0_7, %c0_8] : memref<1x32x128xf32, #tpu.memory_space<vmem>>, vector<1x32x128xf32>
      %c0_i32_9 = arith.constant 0 : i32
      %c128_i32 = arith.constant 128 : i32
      %11 = arith.muli %c0_i32_9, %c128_i32 : i32
      %12 = tpu.assume_multiple %11, 128 : i32
      %c0_10 = arith.constant 0 : index
      %c0_11 = arith.constant 0 : index
      %13 = arith.index_cast %12 : i32 to index
      %14 = vector.load %arg2[%c0_10, %c0_11, %13] : memref<1x32x256xf32, #tpu.memory_space<vmem>>, vector<1x32x128xf32>
      %15 = arith.addf %9, %14 : vector<1x32x128xf32>
      %16 = arith.maximumf %10, %14 : vector<1x32x128xf32>
      %c1_i32 = arith.constant 1 : i32
      %c128_i32_12 = arith.constant 128 : i32
      %17 = arith.muli %c1_i32, %c128_i32_12 : i32
      %18 = tpu.assume_multiple %17, 128 : i32
      %c0_13 = arith.constant 0 : index
      %c0_14 = arith.constant 0 : index
      %19 = arith.index_cast %18 : i32 to index
      %20 = vector.load %arg2[%c0_13, %c0_14, %19] : memref<1x32x256xf32, #tpu.memory_space<vmem>>, vector<1x32x128xf32>
      %21 = arith.addf %15, %20 : vector<1x32x128xf32>
      %22 = arith.maximumf %16, %20 : vector<1x32x128xf32>
      %c2_i32 = arith.constant 2 : i32
      %c0_15 = arith.constant 0 : index
      %c0_16 = arith.constant 0 : index
      %c0_17 = arith.constant 0 : index
      %23 = vector.load %arg9[%c0_15, %c0_16, %c0_17] : memref<1x32x128xf32, #tpu.memory_space<vmem>>, vector<1x32x128xf32>
      tpu.vector_store %arg9[%c0_15, %c0_16, %c0_17], %21 {strides = array<i32>} : memref<1x32x128xf32, #tpu.memory_space<vmem>>, vector<1x32x128xf32>,
      %c0_18 = arith.constant 0 : index
      %c0_19 = arith.constant 0 : index
      %c0_20 = arith.constant 0 : index
      %24 = vector.load %arg10[%c0_18, %c0_19, %c0_20] : memref<1x32x128xf32, #tpu.memory_space<vmem>>, vector<1x32x128xf32>
      tpu.vector_store %arg10[%c0_18, %c0_19, %c0_20], %22 {strides = array<i32>} : memref<1x32x128xf32, #tpu.memory_space<vmem>>, vector<1x32x128xf32>,
    } else {
    }
    %7 = arith.extui %3 : i1 to i32
    %c0_i32_3 = arith.constant 0 : i32
    %8 = arith.cmpi ne, %7, %c0_i32_3 : i32
    scf.if %8 {
      %c0 = arith.constant 0 : index
      %c0_4 = arith.constant 0 : index
      %c0_5 = arith.constant 0 : index
      %9 = vector.load %arg9[%c0, %c0_4, %c0_5] : memref<1x32x128xf32, #tpu.memory_space<vmem>>, vector<1x32x128xf32>
      %c0_6 = arith.constant 0 : index
      %c0_7 = arith.constant 0 : index
      %c0_8 = arith.constant 0 : index
      %10 = vector.load %arg10[%c0_6, %c0_7, %c0_8] : memref<1x32x128xf32, #tpu.memory_space<vmem>>, vector<1x32x128xf32>
      %c0_i32_9 = arith.constant 0 : i32
      %c128_i32 = arith.constant 128 : i32
      %11 = arith.muli %c0_i32_9, %c128_i32 : i32
      %12 = tpu.assume_multiple %11, 128 : i32
      %c0_10 = arith.constant 0 : index
      %c0_11 = arith.constant 0 : index
      %13 = arith.index_cast %12 : i32 to index
      %14 = vector.load %arg2[%c0_10, %c0_11, %13] : memref<1x32x256xf32, #tpu.memory_space<vmem>>, vector<1x32x128xf32>
      %15 = arith.addf %9, %14 : vector<1x32x128xf32>
      %16 = arith.maximumf %10, %14 : vector<1x32x128xf32>
      %c1_i32 = arith.constant 1 : i32
      %c128_i32_12 = arith.constant 128 : i32
      %17 = arith.muli %c1_i32, %c128_i32_12 : i32
      %18 = tpu.assume_multiple %17, 128 : i32
      %c0_13 = arith.constant 0 : index
      %c0_14 = arith.constant 0 : index
      %19 = arith.index_cast %18 : i32 to index
      %20 = vector.load %arg2[%c0_13, %c0_14, %19] : memref<1x32x256xf32, #tpu.memory_space<vmem>>, vector<1x32x128xf32>
      %21 = arith.addf %15, %20 : vector<1x32x128xf32>
      %22 = arith.maximumf %16, %20 : vector<1x32x128xf32>
      %c2_i32 = arith.constant 2 : i32
      %cst = arith.constant dense<0.000000e+00> : vector<1x32xf32>
      %23 = vector.multi_reduction <add>, %21, %cst [2] : vector<1x32x128xf32> to vector<1x32xf32>
      %cst_15 = arith.constant 3.906250e-03 : f32
      %24 = vector.broadcast %cst_15 : f32 to vector<1x32xf32>
      %25 = arith.mulf %23, %24 : vector<1x32xf32>
      %cst_16 = arith.constant dense<0xFF800000> : vector<1x32xf32>
      %26 = vector.multi_reduction <maximumf>, %22, %cst_16 [2] : vector<1x32x128xf32> to vector<1x32xf32>
      %27 = tpu.concatenate %25, %26 in 0 : vector<1x32xf32>, vector<1x32xf32> -> vector<2x32xf32>
      %c0_17 = arith.constant 0 : index
      %c0_18 = arith.constant 0 : index
      %28 = vector.load %arg3[%c0_17, %c0_18] : memref<32x2xf32, #tpu.memory_space<vmem>>, vector<32x2xf32>
      %cst_19 = arith.constant dense<0.000000e+00> : vector<2x2xf32>
      %29 = tpu.matmul %27, %28, %cst_19 {dimension_numbers = #tpu.dot_dimension_numbers<[1], [0], [0], [1], [0, 0, 1, 1], [], []>} : vector<2x32xf32>, vector<32x2xf32>, vector<2x2xf32> -> vector<2x2xf32>
      %cst_20 = arith.constant 0.000000e+00 : f32
      %30 = vector.broadcast %cst_20 : f32 to vector<2x2xf32>
      %31 = arith.maximumf %29, %30 : vector<2x2xf32>
      %c0_21 = arith.constant 0 : index
      %c0_22 = arith.constant 0 : index
      %32 = vector.load %arg4[%c0_21, %c0_22] : memref<2x32xf32, #tpu.memory_space<vmem>>, vector<2x32xf32>
      %cst_23 = arith.constant dense<0.000000e+00> : vector<2x32xf32>
      %33 = tpu.matmul %31, %32, %cst_23 {dimension_numbers = #tpu.dot_dimension_numbers<[1], [0], [0], [1], [0, 0, 1, 1], [], []>} : vector<2x2xf32>, vector<2x32xf32>, vector<2x32xf32> -> vector<2x32xf32>
      %34 = vector.extract_strided_slice %33 {offsets = [0, 0], sizes = [1, 32], strides = [1, 1]} : vector<2x32xf32> to vector<1x32xf32>
      %35 = vector.extract_strided_slice %33 {offsets = [1, 0], sizes = [1, 32], strides = [1, 1]} : vector<2x32xf32> to vector<1x32xf32>
      %c0_24 = arith.constant 0 : index
      %c0_25 = arith.constant 0 : index
      %36 = vector.load %arg5[%c0_24, %c0_25] : memref<32x32xf32, #tpu.memory_space<vmem>>, vector<32x32xf32>
      %cst_26 = arith.constant dense<0.000000e+00> : vector<1x32xf32>
      %37 = tpu.matmul %34, %36, %cst_26 {dimension_numbers = #tpu.dot_dimension_numbers<[1], [0], [0], [1], [0, 0, 1, 1], [], []>} : vector<1x32xf32>, vector<32x32xf32>, vector<1x32xf32> -> vector<1x32xf32>
      %c0_27 = arith.constant 0 : index
      %c0_28 = arith.constant 0 : index
      %38 = vector.load %arg6[%c0_27, %c0_28] : memref<32x32xf32, #tpu.memory_space<vmem>>, vector<32x32xf32>
      %cst_29 = arith.constant dense<0.000000e+00> : vector<1x32xf32>
      %39 = tpu.matmul %35, %38, %cst_29 {dimension_numbers = #tpu.dot_dimension_numbers<[1], [0], [0], [1], [0, 0, 1, 1], [], []>} : vector<1x32xf32>, vector<32x32xf32>, vector<1x32xf32> -> vector<1x32xf32>
      %40 = arith.addf %37, %39 : vector<1x32xf32>
      %c0_30 = arith.constant 0 : index
      %c0_31 = arith.constant 0 : index
      %41 = vector.load %arg7[%c0_30, %c0_31] : memref<1x32xf32, #tpu.memory_space<vmem>>, vector<1x32xf32>
      %42 = arith.addf %40, %41 : vector<1x32xf32>
      %43 = arith.negf %42 : vector<1x32xf32>
      %44 = math.exp %43 : vector<1x32xf32>
      %cst_32 = arith.constant 1.000000e+00 : f32
      %45 = vector.broadcast %cst_32 : f32 to vector<1x32xf32>
      %46 = arith.addf %45, %44 : vector<1x32xf32>
      %47 = arith.divf %45, %46 : vector<1x32xf32>
      %48 = vector.shape_cast %47 : vector<1x32xf32> to vector<1x1x32xf32>
      %c0_33 = arith.constant 0 : index
      %c0_34 = arith.constant 0 : index
      %c0_35 = arith.constant 0 : index
      %49 = vector.load %arg8[%c0_33, %c0_34, %c0_35] : memref<1x1x32xf32, #tpu.memory_space<vmem>>, vector<1x1x32xf32>
      tpu.vector_store %arg8[%c0_33, %c0_34, %c0_35], %48 {strides = array<i32>} : memref<1x1x32xf32, #tpu.memory_space<vmem>>, vector<1x1x32xf32>,
    } else {
    }
    return
  }
  func.func @transform_0(%arg0: i32, %arg1: i32) -> (i32, i32, i32) {
    %c0_i32 = arith.constant 0 : i32
    %c0_i32_0 = arith.constant 0 : i32
    return %arg0, %c0_i32, %arg1 : i32, i32, i32
  }
  func.func @transform_1(%arg0: i32, %arg1: i32) -> (i32, i32) {
    %c0_i32 = arith.constant 0 : i32
    %c0_i32_0 = arith.constant 0 : i32
    %c0_i32_1 = arith.constant 0 : i32
    return %c0_i32, %c0_i32_0 : i32, i32
  }
  func.func @transform_2(%arg0: i32, %arg1: i32) -> (i32, i32) {
    %c0_i32 = arith.constant 0 : i32
    %c0_i32_0 = arith.constant 0 : i32
    %c0_i32_1 = arith.constant 0 : i32
    return %c0_i32, %c0_i32_0 : i32, i32
  }
  func.func @transform_3(%arg0: i32, %arg1: i32) -> (i32, i32) {
    %c0_i32 = arith.constant 0 : i32
    %c0_i32_0 = arith.constant 0 : i32
    %c0_i32_1 = arith.constant 0 : i32
    return %c0_i32, %c0_i32_0 : i32, i32
  }
  func.func @transform_4(%arg0: i32, %arg1: i32) -> (i32, i32) {
    %c0_i32 = arith.constant 0 : i32
    %c0_i32_0 = arith.constant 0 : i32
    %c0_i32_1 = arith.constant 0 : i32
    return %c0_i32, %c0_i32_0 : i32, i32
  }
  func.func @transform_5(%arg0: i32, %arg1: i32) -> (i32, i32) {
    %c0_i32 = arith.constant 0 : i32
    %c0_i32_0 = arith.constant 0 : i32
    %c0_i32_1 = arith.constant 0 : i32
    return %c0_i32, %c0_i32_0 : i32, i32
  }
  func.func @transform_6(%arg0: i32, %arg1: i32) -> (i32, i32, i32) {
    %c0_i32 = arith.constant 0 : i32
    %c0_i32_0 = arith.constant 0 : i32
    %c0_i32_1 = arith.constant 0 : i32
    return %arg0, %c0_i32, %c0_i32_0 : i32, i32, i32
  }
}

</mosaic_0001>

<llo_original>
// kernel: tpu_custom_call.1
$region0: #{tpu_custom_call.1}
  #allocation0 [shape = 'u32[]', space=smem, size = 0x4, offset = 0x4, fixed_abs, tag = 'smem constant byte address 0x4 - core index']
  #allocation1 [shape = 'u32[144,128]{1,0:T(1,128)}', space=vmem, size = 0x12000, scoped, tag = 'internal scratch']
  #allocation2 [shape = 'f32[1,32,128]{2,1,0:T(8,128)}', space=vmem, size = 0x4000, scoped, tag = 'scratch operand']
  #allocation3 [shape = 'f32[1,32,128]{2,1,0:T(8,128)}', space=vmem, size = 0x4000, scoped, tag = 'scratch operand']
  %s0 = inlined_call_operand.hbm [shape: f32[2,32,256], index: 0, kind: input, shape index: {}]
  %s1 = inlined_call_operand.vmem [shape: f32[32,2], index: 1, kind: input, shape index: {}]
  %s2 = inlined_call_operand.vmem [shape: f32[2,32], index: 2, kind: input, shape index: {}]
  %s3 = inlined_call_operand.vmem [shape: f32[32,32], index: 3, kind: input, shape index: {}]
  %s4 = inlined_call_operand.hbm [shape: f32[32,32], index: 4, kind: input, shape index: {}]
  %s5 = inlined_call_operand.vmem [shape: f32[1,32], index: 5, kind: input, shape index: {}]
  %s6 = inlined_call_operand.hbm [shape: f32[2,1,32], index: 6, kind: output, shape index: {}]
  %s7 = sld [smem:[#allocation0]]
  $region77: #{tpu_custom_call.1} parent=0
    _
  %s9 = ssub.s32 1, %s7
  %s10 = scalar_select 0, %s9, %s7
  $region1: #{tpu_custom_call.1} parent=0
    #allocation4 [shape = 'u8[65536]{0}', space=vmem, size = 0x10000, scoped, tag = 'input window, operand 0']
    #allocation5 [shape = 's32[2]{0}', space=sflag, size = 0x8, scoped, tag = 'scoped memory for tpu_custom_call.1']
    #allocation6 [shape = 's32[2]{0}', space=sflag, size = 0x8, scoped, tag = 'scoped memory for tpu_custom_call.1']
    #allocation7 [shape = 'u8[16384]{0}', space=vmem, size = 0x4000, scoped, tag = 'input window, operand 4, single buffered']
    #allocation8 [shape = 's32[1]{0}', space=sflag, size = 0x4, scoped, tag = 'scoped memory for tpu_custom_call.1']
    #allocation9 [shape = 'u8[1024]{0}', space=vmem, size = 0x400, scoped, tag = 'output window, operand 0']
    %11 = vsyncpa [#allocation5], 0
    %s12 = scalar_lea.sflag [#allocation5], 1
    %13 = vsyncpa %s12, 0
    %14 = vsyncpa [#allocation8], 0
    %15 = vsyncpa [#allocation6], 0
    %s16 = scalar_lea.sflag [#allocation6], 1
    %17 = vsyncpa %s16, 0
    loop: start=0, step=1, limit=4
    $region2: #{tpu_custom_call.1} parent=1 // loop_pre_header
      _
    $region3: #{tpu_custom_call.1} parent=1 // loop_header
      %s19 = sphi 0, %s23
      %p20 = scmp.ge.s32.totalorder %s19, 4
      %s26 = sphi 0, %s38
      %s27 = sphi 0, %s34
      %s28 = sphi 0, %s26
      %s29 = sphi 0, %s27
      %s30 = sphi 0, %s28
      %s31 = sphi 0, %s29
      %s43 = sphi 0, %s45
      %s46 = sphi 0, %s43
      %s47 = sphi 0, %s46
      %s63 = sphi 0, %s47
      %s67 = sphi 0, %s67
      %s69 = sphi 0, %s67
      %s70 = sphi 0, %s69
      %s84 = sphi 0, %s70
      %s88 = sphi 0, %s88
      %s90 = sphi 0, %s88
      %s91 = sphi 0, %s90
      %s105 = sphi 0, %s91
      %s109 = sphi 0, %s109
      %s111 = sphi 0, %s109
      %s112 = sphi 0, %s111
      %s126 = sphi 0, %s112
      %s130 = sphi 0, %s130
      %s132 = sphi 0, %s130
      %s133 = sphi 0, %s132
      %s147 = sphi 0, %s133
      %s151 = sphi 0, %s151
      %s153 = sphi 0, %s151
      %s154 = sphi 0, %s153
      %s168 = sphi 0, %s154
      %s174 = sphi 0, %s176
      %s177 = sphi 0, %s174
      %s178 = sphi 0, %s177
      %s194 = sphi 0, %s178
    $region4: #{tpu_custom_call.1} parent=1 // loop_header_branch
      %22 = sbr.rel (%p20) target = $region8
    $region5: #{tpu_custom_call.1} parent=1 // loop_body
      %s24 = ssub.s32 %s19, 1
      %s25 = ssub.s32 %s19, 2
      %s32 = sadd.s32 1, %s27
      %p33 = scmp.ge.s32.totalorder %s32, 1
      %s34 = scalar_select %p33, 0, %s32
      %s35 = sadd.s32 1, %s26
      %s36 = scalar_select %p33, %s35, %s26
      %p37 = scmp.ge.s32.totalorder %s36, 2
      %s38 = scalar_select %p37, 0, %s36
      %s39 = ssub.s32 %s26, %s38
      %s40 = ssub.s32 %s27, %s34
      %s41 = sor.u32 %s39, %s40
      %p42 = scmp.eq.s32.totalorder %s41, 0
      %s44 = sadd.s32 %s43, 1
      %s45 = scalar_select %p42, %s43, %s44
      %p48 = pneg %p42
      %p49 = scmp.eq.s32.totalorder %s19, 1
      %p50 = por %p48, %p49
      %p51 = scmp.ne.s32.totalorder %s43, %s46
      %p52 = scmp.eq.s32.totalorder %s19, 0
      %p53 = por %p51, %p52
      %p54 = scmp.ne.s32.totalorder %s43, %s46
      %p55 = scmp.eq.s32.totalorder %s24, 1
      %p56 = por %p54, %p55
      %p57 = scmp.ne.s32.totalorder %s46, %s47
      %p58 = scmp.eq.s32.totalorder %s24, 0
      %p59 = por %p57, %p58
      %p60 = scmp.ne.s32.totalorder %s46, %s47
      %p61 = scmp.eq.s32.totalorder %s25, 1
      %p62 = por %p60, %p61
      %p64 = scmp.ne.s32.totalorder %s47, %s63
      %p65 = scmp.eq.s32.totalorder %s25, 0
      %p66 = por %p64, %p65
      %s68 = sadd.s32 %s67, 1
      %p71 = scmp.eq.s32.totalorder %s19, 1
      %p72 = scmp.ne.s32.totalorder %s67, %s69
      %p73 = scmp.eq.s32.totalorder %s19, 0
      %p74 = por %p72, %p73
      %p75 = scmp.ne.s32.totalorder %s67, %s69
      %p76 = scmp.eq.s32.totalorder %s24, 1
      %p77 = por %p75, %p76
      %p78 = scmp.ne.s32.totalorder %s69, %s70
      %p79 = scmp.eq.s32.totalorder %s24, 0
      %p80 = por %p78, %p79
      %p81 = scmp.ne.s32.totalorder %s69, %s70
      %p82 = scmp.eq.s32.totalorder %s25, 1
      %p83 = por %p81, %p82
      %p85 = scmp.ne.s32.totalorder %s70, %s84
      %p86 = scmp.eq.s32.totalorder %s25, 0
      %p87 = por %p85, %p86
      %s89 = sadd.s32 %s88, 1
      %p92 = scmp.eq.s32.totalorder %s19, 1
      %p93 = scmp.ne.s32.totalorder %s88, %s90
      %p94 = scmp.eq.s32.totalorder %s19, 0
      %p95 = por %p93, %p94
      %p96 = scmp.ne.s32.totalorder %s88, %s90
      %p97 = scmp.eq.s32.totalorder %s24, 1
      %p98 = por %p96, %p97
      %p99 = scmp.ne.s32.totalorder %s90, %s91
      %p100 = scmp.eq.s32.totalorder %s24, 0
      %p101 = por %p99, %p100
      %p102 = scmp.ne.s32.totalorder %s90, %s91
      %p103 = scmp.eq.s32.totalorder %s25, 1
      %p104 = por %p102, %p103
      %p106 = scmp.ne.s32.totalorder %s91, %s105
      %p107 = scmp.eq.s32.totalorder %s25, 0
      %p108 = por %p106, %p107
      %s110 = sadd.s32 %s109, 1
      %p113 = scmp.eq.s32.totalorder %s19, 1
      %p114 = scmp.ne.s32.totalorder %s109, %s111
      %p115 = scmp.eq.s32.totalorder %s19, 0
      %p116 = por %p114, %p115
      %p117 = scmp.ne.s32.totalorder %s109, %s111
      %p118 = scmp.eq.s32.totalorder %s24, 1
      %p119 = por %p117, %p118
      %p120 = scmp.ne.s32.totalorder %s111, %s112
      %p121 = scmp.eq.s32.totalorder %s24, 0
      %p122 = por %p120, %p121
      %p123 = scmp.ne.s32.totalorder %s111, %s112
      %p124 = scmp.eq.s32.totalorder %s25, 1
      %p125 = por %p123, %p124
      %p127 = scmp.ne.s32.totalorder %s112, %s126
      %p128 = scmp.eq.s32.totalorder %s25, 0
      %p129 = por %p127, %p128
      %s131 = sadd.s32 %s130, 1
      %p134 = scmp.eq.s32.totalorder %s19, 1
      %p135 = scmp.ne.s32.totalorder %s130, %s132
      %p136 = scmp.eq.s32.totalorder %s19, 0
      %p137 = por %p135, %p136
      %p138 = scmp.ne.s32.totalorder %s130, %s132
      %p139 = scmp.eq.s32.totalorder %s24, 1
      %p140 = por %p138, %p139
      %p141 = scmp.ne.s32.totalorder %s132, %s133
      %p142 = scmp.eq.s32.totalorder %s24, 0
      %p143 = por %p141, %p142
      %p144 = scmp.ne.s32.totalorder %s132, %s133
      %p145 = scmp.eq.s32.totalorder %s25, 1
      %p146 = por %p144, %p145
      %p148 = scmp.ne.s32.totalorder %s133, %s147
      %p149 = scmp.eq.s32.totalorder %s25, 0
      %p150 = por %p148, %p149
      %s152 = sadd.s32 %s151, 1
      %p155 = scmp.eq.s32.totalorder %s19, 1
      %p156 = scmp.ne.s32.totalorder %s151, %s153
      %p157 = scmp.eq.s32.totalorder %s19, 0
      %p158 = por %p156, %p157
      %p159 = scmp.ne.s32.totalorder %s151, %s153
      %p160 = scmp.eq.s32.totalorder %s24, 1
      %p161 = por %p159, %p160
      %p162 = scmp.ne.s32.totalorder %s153, %s154
      %p163 = scmp.eq.s32.totalorder %s24, 0
      %p164 = por %p162, %p163
      %p165 = scmp.ne.s32.totalorder %s153, %s154
      %p166 = scmp.eq.s32.totalorder %s25, 1
      %p167 = por %p165, %p166
      %p169 = scmp.ne.s32.totalorder %s154, %s168
      %p170 = scmp.eq.s32.totalorder %s25, 0
      %p171 = por %p169, %p170
      %s172 = ssub.s32 %s26, %s38
      %p173 = scmp.eq.s32.totalorder %s172, 0
      %s175 = sadd.s32 %s174, 1
      %s176 = scalar_select %p173, %s174, %s175
      %p179 = pneg %p173
      %p180 = scmp.eq.s32.totalorder %s19, 1
      %p181 = por %p179, %p180
      %p182 = scmp.ne.s32.totalorder %s174, %s177
      %p183 = scmp.eq.s32.totalorder %s19, 0
      %p184 = por %p182, %p183
      %p185 = scmp.ne.s32.totalorder %s174, %s177
      %p186 = scmp.eq.s32.totalorder %s24, 1
      %p187 = por %p185, %p186
      %p188 = scmp.ne.s32.totalorder %s177, %s178
      %p189 = scmp.eq.s32.totalorder %s24, 0
      %p190 = por %p188, %p189
      %p191 = scmp.ne.s32.totalorder %s177, %s178
      %p192 = scmp.eq.s32.totalorder %s25, 1
      %p193 = por %p191, %p192
      %p195 = scmp.ne.s32.totalorder %s178, %s194
      %p196 = scmp.eq.s32.totalorder %s25, 0
      %p197 = por %p195, %p196
      %p198 = scmp.le.s32.totalorder 1, %s19
      %p199 = scmp.lt.s32.totalorder %s19, 3
      %p200 = pnand %p198, %p199
      %p201 = pneg %p200
      // Predicated region
      $region9: #{tpu_custom_call.1} parent=5 // pred_check
        _
      $region10: #{tpu_custom_call.1} parent=5 // pred_check_branch
        %203 = sbr.rel (%p200) target = $region12
      $region11: #{tpu_custom_call.1} parent=5 // pred_region
        %s204 = ssub.s32 %s19, 1
        // Predicated region
        $region13: #{tpu_custom_call.1} parent=11 // pred_check
          %p205 = pneg %p80
        $region14: #{tpu_custom_call.1} parent=11 // pred_check_branch
          %207 = sbr.rel (%p205) target = $region16
        $region15: #{tpu_custom_call.1} parent=11 // pred_region
          _
        $region16: #{tpu_custom_call.1} parent=11 // pred_fallthru
          _
        // Predicated region
        $region17: #{tpu_custom_call.1} parent=11 // pred_check
          %p208 = pneg %p101
        $region18: #{tpu_custom_call.1} parent=11 // pred_check_branch
          %210 = sbr.rel (%p208) target = $region20
        $region19: #{tpu_custom_call.1} parent=11 // pred_region
          _
        $region20: #{tpu_custom_call.1} parent=11 // pred_fallthru
          _
        // Predicated region
        $region21: #{tpu_custom_call.1} parent=11 // pred_check
          %p211 = pneg %p122
        $region22: #{tpu_custom_call.1} parent=11 // pred_check_branch
          %213 = sbr.rel (%p211) target = $region24
        $region23: #{tpu_custom_call.1} parent=11 // pred_region
          _
        $region24: #{tpu_custom_call.1} parent=11 // pred_fallthru
          _
        // Predicated region
        $region25: #{tpu_custom_call.1} parent=11 // pred_check
          %p214 = pneg %p143
        $region26: #{tpu_custom_call.1} parent=11 // pred_check_branch
          %216 = sbr.rel (%p214) target = $region28
        $region27: #{tpu_custom_call.1} parent=11 // pred_region
          %s218 = ssub.s32 512, 512
          %219 = vsyncadd [#allocation8], %s218
          %s220 = sshll.u32 [#allocation7], 4
          %s221 = int_to_ptr.vmem [resolvable:$true] %s220
          %226 = dma.hbm_to_vmem [thread:$0]  %s4, 512, %s221, [#allocation8], 128, 128, 8
        $region28: #{tpu_custom_call.1} parent=11 // pred_fallthru
          _
        // Predicated region
        $region29: #{tpu_custom_call.1} parent=11 // pred_check
          %p227 = pneg %p164
        $region30: #{tpu_custom_call.1} parent=11 // pred_check_branch
          %229 = sbr.rel (%p227) target = $region32
        $region31: #{tpu_custom_call.1} parent=11 // pred_region
          _
        $region32: #{tpu_custom_call.1} parent=11 // pred_fallthru
          _
      $region12: #{tpu_custom_call.1} parent=5 // pred_fallthru
        _
      %p230 = scmp.lt.s32.totalorder %s19, 2
      // Predicated region
      $region33: #{tpu_custom_call.1} parent=5 // pred_check
        %p231 = pneg %p230
      $region34: #{tpu_custom_call.1} parent=5 // pred_check_branch
        %233 = sbr.rel (%p231) target = $region36
      $region35: #{tpu_custom_call.1} parent=5 // pred_region
        // Predicated region
        $region37: #{tpu_custom_call.1} parent=35 // pred_check
          %p234 = pneg %p53
        $region38: #{tpu_custom_call.1} parent=35 // pred_check_branch
          %236 = sbr.rel (%p234) target = $region40
        $region39: #{tpu_custom_call.1} parent=35 // pred_region
          %s237 = sand.u32 %s43, 1
          %s238 = scalar_lea.sflag [#allocation5], %s237
          %s239 = sand.u32 %s43, 1
          %s240 = smul.addr %s239, 64
          %s241 = scalar_lea.vmem [#allocation4], %s240
          %s242 = smul.u32 2, %s27
          %s244 = ssub.s32 1024, 1024
          %245 = vsyncadd %s238, %s244
          %s246 = smul.addr %s26, 8
          %s247 = sadd.s32 %s242, %s246
          %s248 = smul.addr %s247, 128
          %s249 = scalar_lea.hbm %s0, %s248
          %s250 = sshll.u32 %s241, 4
          %s251 = int_to_ptr.vmem [resolvable:$true] %s250
          %256 = dma.hbm_to_vmem [thread:$0]  %s249, 1024, %s251, %s238, 256, 256, 16
        $region40: #{tpu_custom_call.1} parent=35 // pred_fallthru
          _
      $region36: #{tpu_custom_call.1} parent=5 // pred_fallthru
        _
      %p257 = scmp.le.s32.totalorder 1, %s19
      %p258 = scmp.lt.s32.totalorder %s19, 3
      %p259 = pnand %p257, %p258
      %p260 = pneg %p259
      // Predicated region
      $region41: #{tpu_custom_call.1} parent=5 // pred_check
        _
      $region42: #{tpu_custom_call.1} parent=5 // pred_check_branch
        %262 = sbr.rel (%p259) target = $region44
      $region43: #{tpu_custom_call.1} parent=5 // pred_region
        %s263 = ssub.s32 %s19, 1
        %s264 = sand.u32 %s46, 1
        %s265 = scalar_lea.sflag [#allocation5], %s264
        %s266 = sand.u32 %s46, 1
        %s267 = smul.addr %s266, 64
        %s268 = scalar_lea.vmem [#allocation4], %s267
        // Predicated region
        $region45: #{tpu_custom_call.1} parent=43 // pred_check
          %p269 = pneg %p59
        $region46: #{tpu_custom_call.1} parent=43 // pred_check_branch
          %271 = sbr.rel (%p269) target = $region48
        $region47: #{tpu_custom_call.1} parent=43 // pred_region
          %272 = dma.done %s265, 1024
        $region48: #{tpu_custom_call.1} parent=43 // pred_fallthru
          _
        // Predicated region
        $region49: #{tpu_custom_call.1} parent=43 // pred_check
          %p273 = pneg %p143
        $region50: #{tpu_custom_call.1} parent=43 // pred_check_branch
          %275 = sbr.rel (%p273) target = $region52
        $region51: #{tpu_custom_call.1} parent=43 // pred_region
          %276 = dma.done [#allocation8], 512
        $region52: #{tpu_custom_call.1} parent=43 // pred_fallthru
          _
        %s277 = sand.u32 %s46, 1
        %s278 = scalar_lea.sflag [#allocation5], %s277
        %s279 = sand.u32 %s46, 1
        %s280 = smul.addr %s279, 64
        %s281 = scalar_lea.vmem [#allocation4], %s280
        %p282 = pneg %p59
        %p283 = pneg %p56
        %p284 = pneg %p80
        %p285 = pneg %p77
        %p286 = pneg %p101
        %p287 = pneg %p98
        %p288 = pneg %p122
        %p289 = pneg %p119
        %p290 = pneg %p143
        %p291 = pneg %p140
        %p292 = pneg %p164
        %p293 = pneg %p161
        %p294 = pneg %p190
        %p295 = pneg %p187
        %s296 = sand.u32 %s177, 1
        %s297 = scalar_lea.sflag [#allocation6], %s296
        %s298 = sand.u32 %s177, 1
        %s299 = scalar_lea.vmem [#allocation9], %s298
        %s300 = smul.u32 2, %s29
        %p301 = scmp.eq.s32.totalorder %s29, 0
        // Predicated region
        $region53: #{tpu_custom_call.1} parent=43 // pred_check
          %p302 = pneg %p301
        $region54: #{tpu_custom_call.1} parent=43 // pred_check_branch
          %304 = sbr.rel (%p302) target = $region56
        $region55: #{tpu_custom_call.1} parent=43 // pred_region
          %305 = vst [vmem:[#allocation2] sm:$0xff] 0.0
          %306 = vst [vmem:[#allocation2 + $0x8] sm:$0xff] 0.0
          %307 = vst [vmem:[#allocation2 + $0x10] sm:$0xff] 0.0
          %308 = vst [vmem:[#allocation2 + $0x18] sm:$0xff] 0.0
          %309 = vst [vmem:[#allocation3] sm:$0xff] -inf
          %310 = vst [vmem:[#allocation3 + $0x8] sm:$0xff] -inf
          %311 = vst [vmem:[#allocation3 + $0x10] sm:$0xff] -inf
          %312 = vst [vmem:[#allocation3 + $0x18] sm:$0xff] -inf
        $region56: #{tpu_custom_call.1} parent=43 // pred_fallthru
          _
        %p313 = scmp.ne.s32.totalorder %s29, 0
        // Predicated region
        $region57: #{tpu_custom_call.1} parent=43 // pred_check
          %p314 = pneg %p313
        $region58: #{tpu_custom_call.1} parent=43 // pred_check_branch
          %316 = sbr.rel (%p314) target = $region60
        $region59: #{tpu_custom_call.1} parent=43 // pred_region
          %v317 = vld [vmem:[#allocation2] sm:$0xff]
          %v318 = vld [vmem:[#allocation2 + $0x8] sm:$0xff]
          %v319 = vld [vmem:[#allocation2 + $0x10] sm:$0xff]
          %v320 = vld [vmem:[#allocation2 + $0x18] sm:$0xff]
          %v321 = vld [vmem:[#allocation3] sm:$0xff]
          %v322 = vld [vmem:[#allocation3 + $0x8] sm:$0xff]
          %v323 = vld [vmem:[#allocation3 + $0x10] sm:$0xff]
          %v324 = vld [vmem:[#allocation3 + $0x18] sm:$0xff]
          %v325 = vld [vmem:[%s268] sm:$0xff]
          %v326 = vld [vmem:[%s268 + $0x10] sm:$0xff]
          %v327 = vld [vmem:[%s268 + $0x20] sm:$0xff]
          %v328 = vld [vmem:[%s268 + $0x30] sm:$0xff]
          %v329 = vadd.f32 %v317, %v325
          %v330 = vadd.f32 %v318, %v326
          %v331 = vadd.f32 %v319, %v327
          %v332 = vadd.f32 %v320, %v328
          %v333 = vmax.f32 %v321, %v325
          %v334 = vmax.f32 %v322, %v326
          %v335 = vmax.f32 %v323, %v327
          %v336 = vmax.f32 %v324, %v328
          %s337 = scalar_lea.vmem %s268, 8 [#allocation4]
          %v338 = vld [vmem:[%s337] sm:$0xff]
          %v339 = vld [vmem:[%s337 + $0x10] sm:$0xff]
          %v340 = vld [vmem:[%s337 + $0x20] sm:$0xff]
          %v341 = vld [vmem:[%s337 + $0x30] sm:$0xff]
          %v342 = vadd.f32 %v329, %v338
          %v343 = vadd.f32 %v330, %v339
          %v344 = vadd.f32 %v331, %v340
          %v345 = vadd.f32 %v332, %v341
          %v346 = vmax.f32 %v333, %v338
          %v347 = vmax.f32 %v334, %v339
          %v348 = vmax.f32 %v335, %v340
          %v349 = vmax.f32 %v336, %v341
          %350 = vst [vmem:[#allocation2] sm:$0xff] %v342
          %351 = vst [vmem:[#allocation2 + $0x8] sm:$0xff] %v343
          %352 = vst [vmem:[#allocation2 + $0x10] sm:$0xff] %v344
          %353 = vst [vmem:[#allocation2 + $0x18] sm:$0xff] %v345
          %354 = vst [vmem:[#allocation3] sm:$0xff] %v346
          %355 = vst [vmem:[#allocation3 + $0x8] sm:$0xff] %v347
          %356 = vst [vmem:[#allocation3 + $0x10] sm:$0xff] %v348
          %357 = vst [vmem:[#allocation3 + $0x18] sm:$0xff] %v349
        $region60: #{tpu_custom_call.1} parent=43 // pred_fallthru
          _
        // Predicated region
        $region61: #{tpu_custom_call.1} parent=43 // pred_check
          %p358 = pneg %p301
        $region62: #{tpu_custom_call.1} parent=43 // pred_check_branch
          %360 = sbr.rel (%p358) target = $region64
        $region63: #{tpu_custom_call.1} parent=43 // pred_region
          %v361 = vld [vmem:[#allocation2] sm:$0xff]
          %v362 = vld [vmem:[#allocation2 + $0x8] sm:$0xff]
          %v363 = vld [vmem:[#allocation2 + $0x10] sm:$0xff]
          %v364 = vld [vmem:[#allocation2 + $0x18] sm:$0xff]
          %v365 = vld [vmem:[#allocation3] sm:$0xff]
          %v366 = vld [vmem:[#allocation3 + $0x8] sm:$0xff]
          %v367 = vld [vmem:[#allocation3 + $0x10] sm:$0xff]
          %v368 = vld [vmem:[#allocation3 + $0x18] sm:$0xff]
          %v369 = vld [vmem:[%s268] sm:$0xff]
          %v370 = vld [vmem:[%s268 + $0x10] sm:$0xff]
          %v371 = vld [vmem:[%s268 + $0x20] sm:$0xff]
          %v372 = vld [vmem:[%s268 + $0x30] sm:$0xff]
          %v373 = vadd.f32 %v361, %v369
          %v374 = vadd.f32 %v362, %v370
          %v375 = vadd.f32 %v363, %v371
          %v376 = vadd.f32 %v364, %v372
          %v377 = vmax.f32 %v365, %v369
          %v378 = vmax.f32 %v366, %v370
          %v379 = vmax.f32 %v367, %v371
          %v380 = vmax.f32 %v368, %v372
          %s381 = scalar_lea.vmem %s268, 8 [#allocation4]
          %v382 = vld [vmem:[%s381] sm:$0xff]
          %v383 = vld [vmem:[%s381 + $0x10] sm:$0xff]
          %v384 = vld [vmem:[%s381 + $0x20] sm:$0xff]
          %v385 = vld [vmem:[%s381 + $0x30] sm:$0xff]
          %v386 = vadd.f32 %v373, %v382
          %v387 = vadd.f32 %v374, %v383
          %v388 = vadd.f32 %v375, %v384
          %v389 = vadd.f32 %v376, %v385
          %v390 = vmax.f32 %v377, %v382
          %v391 = vmax.f32 %v378, %v383
          %v392 = vmax.f32 %v379, %v384
          %v393 = vmax.f32 %v380, %v385
          %394 = vadd.xlane.f32.xlu0 %v386
          %v395 = vpop.xlane.xlu0 %394
          %396 = vadd.xlane.f32.xlu0 %v387
          %v397 = vpop.xlane.xlu0 %396
          %398 = vadd.xlane.f32.xlu0 %v388
          %v399 = vpop.xlane.xlu0 %398
          %400 = vadd.xlane.f32.xlu0 %v389
          %v401 = vpop.xlane.xlu0 %400
          %v402 = vmul.f32 %v395, 0.00390625
          %v403 = vmul.f32 %v397, 0.00390625
          %v404 = vmul.f32 %v399, 0.00390625
          %v405 = vmul.f32 %v401, 0.00390625
          %406 = vmax.xlane.f32.xlu0 %v390
          %v407 = vpop.xlane.xlu0 %406
          %408 = vmax.xlane.f32.xlu0 %v391
          %v409 = vpop.xlane.xlu0 %408
          %410 = vmax.xlane.f32.xlu0 %v392
          %v411 = vpop.xlane.xlu0 %410
          %412 = vmax.xlane.f32.xlu0 %v393
          %v413 = vpop.xlane.xlu0 %412
          %v418 = vlaneseq
          %v419 = vand.u32 %v418, 127
          %v420 = vlaneseq
          %v421 = vshrl.u32 %v420, 7
          %v422 = vsub.s32 %v419, %v421
          %v423 = vrot.slane %v402, %v422
          %v424 = vadd.s32 %v419, 4294967288
          %v425 = vlaneseq
          %v426 = vshrl.u32 %v425, 7
          %v427 = vsub.s32 %v424, %v426
          %v428 = vrot.slane %v403, %v427
          %vm429 = vcmask 130112
          %v430 = vsel %vm429, %v428, %v423
          %v431 = vadd.s32 %v419, 4294967280
          %v432 = vlaneseq
          %v433 = vshrl.u32 %v432, 7
          %v434 = vsub.s32 %v431, %v433
          %v435 = vrot.slane %v404, %v434
          %vm436 = vcmask 195712
          %v437 = vsel %vm436, %v435, %v430
          %v438 = vadd.s32 %v419, 4294967272
          %v439 = vlaneseq
          %v440 = vshrl.u32 %v439, 7
          %v441 = vsub.s32 %v438, %v440
          %v442 = vrot.slane %v405, %v441
          %vm443 = vcmask 261312
          %v444 = vsel %vm443, %v442, %v437
          %v450 = vlaneseq
          %v451 = vshrl.u32 %v450, 7
          %v452 = vsub.s32 %v419, %v451
          %v453 = vrot.slane %v407, %v452
          %v454 = vlaneseq
          %v455 = vshrl.u32 %v454, 7
          %v456 = vsub.s32 %v424, %v455
          %v457 = vrot.slane %v409, %v456
          %v458 = vsel %vm429, %v457, %v453
          %v459 = vlaneseq
          %v460 = vshrl.u32 %v459, 7
          %v461 = vsub.s32 %v431, %v460
          %v462 = vrot.slane %v411, %v461
          %v463 = vsel %vm436, %v462, %v458
          %v464 = vlaneseq
          %v465 = vshrl.u32 %v464, 7
          %v466 = vsub.s32 %v438, %v465
          %v467 = vrot.slane %v413, %v466
          %v468 = vsel %vm443, %v467, %v463
          %vm470 = vcmask 1040384
          %v471 = vsel %vm470, %v444, %v468
          %v472 = vld [vmem:[%s1] sm:$0xff]
          %v473 = vld [vmem:[%s1 + $0x8] sm:$0xff]
          %v474 = vld [vmem:[%s1 + $0x10] sm:$0xff]
          %v475 = vld [vmem:[%s1 + $0x18] sm:$0xff]
          %vm476 = vcmask 261120
          %v478 = vsel %vm476, %v471, 0
          %480 = vmatprep.subr.mxu0 0.0
          %481 = vmatpush1.msra.mxu0 %v472
          %482 = vmatprep.subr.mxu0 0.0
          %483 = vmatpush1.msra.mxu0 %v473
          %484 = vmatprep.subr.mxu0 0.0
          %485 = vmatpush1.msra.mxu0 %v474
          %486 = vmatprep.subr.mxu0 0.0
          %487 = vmatpush1.msra.mxu0 %v475
          %488 = vmatprep.subr.mxu0 0.0
          %489 = vmatpush1.msra.mxu0 0.0
          %490 = vmatprep.subr.mxu0 0.0
          %491 = vmatpush1.msra.mxu0 0.0
          %492 = vmatprep.subr.mxu0 0.0
          %493 = vmatpush1.msra.mxu0 0.0
          %494 = vmatprep.subr.mxu0 0.0
          %495 = vmatpush1.msra.mxu0 0.0
          %496 = vmatprep.subr.mxu0 0.0
          %497 = vmatpush1.msra.mxu0 0.0
          %498 = vmatprep.subr.mxu0 0.0
          %499 = vmatpush1.msra.mxu0 0.0
          %500 = vmatprep.subr.mxu0 0.0
          %501 = vmatpush1.msra.mxu0 0.0
          %502 = vmatprep.subr.mxu0 0.0
          %503 = vmatpush1.msra.mxu0 0.0
          %504 = vmatprep.subr.mxu0 0.0
          %505 = vmatpush1.msra.mxu0 0.0
          %506 = vmatprep.subr.mxu0 0.0
          %507 = vmatpush1.msra.mxu0 0.0
          %508 = vmatprep.subr.mxu0 0.0
          %509 = vmatpush1.msra.mxu0 0.0
          %510 = vmatprep.subr.mxu0 0.0
          %511 = vmatpush1.msra.mxu0 0.0
          %512 = vmatprep.subr.mxu0 0.0
          %513 = vmatpush1.msra.mxu0 0.0
          %514 = vmatprep.subr.mxu0 0.0
          %515 = vmatpush1.msra.mxu0 0.0
          %516 = vmatprep.subr.mxu0 0.0
          %517 = vmatpush1.msra.mxu0 0.0
          %518 = vmatprep.subr.mxu0 0.0
          %519 = vmatpush1.msra.mxu0 0.0
          %520 = vmatprep.subr.mxu0 0.0
          %521 = vmatpush1.msra.mxu0 0.0
          %522 = vmatprep.subr.mxu0 0.0
          %523 = vmatpush1.msra.mxu0 0.0
          %524 = vmatprep.subr.mxu0 0.0
          %525 = vmatpush1.msra.mxu0 0.0
          %526 = vmatprep.subr.mxu0 0.0
          %527 = vmatpush1.msra.mxu0 0.0
          %528 = vmatprep.subr.mxu0 0.0
          %529 = vmatpush1.msra.mxu0 0.0
          %530 = vmatprep.subr.mxu0 0.0
          %531 = vmatpush1.msra.mxu0 0.0
          %532 = vmatprep.subr.mxu0 0.0
          %533 = vmatpush1.msra.mxu0 0.0
          %534 = vmatprep.subr.mxu0 0.0
          %535 = vmatpush1.msra.mxu0 0.0
          %536 = vmatprep.subr.mxu0 0.0
          %537 = vmatpush1.msra.mxu0 0.0
          %538 = vmatprep.subr.mxu0 0.0
          %539 = vmatpush1.msra.mxu0 0.0
          %540 = vmatprep.subr.mxu0 0.0
          %541 = vmatpush1.msra.mxu0 0.0
          %542 = vmatprep.subr.mxu0 0.0
          %543 = vmatpush1.msra.mxu0 0.0
          %544 = vmatprep.mubr.f32.mxu0 0.0
          %545 = vmatmul.mubr.f32.gmra.mrb[0].mxu0 %v478
          %v546 = vpop.f32.mrb[0].mxu0
          %v547 = vadd.f32 0.0, %v546
          %v548 = vpop.f32.mrb[0].mxu0
          %549 = vdwg.mxu0
          %v550 = vmax.f32 %v547, 0.0
          %v551 = vld [vmem:[%s2] sm:$0x3]
          %vm552 = vcmask 15360
          %v554 = vsel %vm552, %v550, 0
          %vm556 = vcmask 1041408
          %v558 = vsel %vm556, %v551, 0
          %560 = vmatprep.subr.mxu0 0.0
          %561 = vmatpush1.msra.mxu0 %v558
          %562 = vmatprep.subr.mxu0 0.0
          %563 = vmatpush1.msra.mxu0 0.0
          %564 = vmatprep.subr.mxu0 0.0
          %565 = vmatpush1.msra.mxu0 0.0
          %566 = vmatprep.subr.mxu0 0.0
          %567 = vmatpush1.msra.mxu0 0.0
          %568 = vmatprep.subr.mxu0 0.0
          %569 = vmatpush1.msra.mxu0 0.0
          %570 = vmatprep.subr.mxu0 0.0
          %571 = vmatpush1.msra.mxu0 0.0
          %572 = vmatprep.subr.mxu0 0.0
          %573 = vmatpush1.msra.mxu0 0.0
          %574 = vmatprep.subr.mxu0 0.0
          %575 = vmatpush1.msra.mxu0 0.0
          %576 = vmatprep.subr.mxu0 0.0
          %577 = vmatpush1.msra.mxu0 0.0
          %578 = vmatprep.subr.mxu0 0.0
          %579 = vmatpush1.msra.mxu0 0.0
          %580 = vmatprep.subr.mxu0 0.0
          %581 = vmatpush1.msra.mxu0 0.0
          %582 = vmatprep.subr.mxu0 0.0
          %583 = vmatpush1.msra.mxu0 0.0
          %584 = vmatprep.subr.mxu0 0.0
          %585 = vmatpush1.msra.mxu0 0.0
          %586 = vmatprep.subr.mxu0 0.0
          %587 = vmatpush1.msra.mxu0 0.0
          %588 = vmatprep.subr.mxu0 0.0
          %589 = vmatpush1.msra.mxu0 0.0
          %590 = vmatprep.subr.mxu0 0.0
          %591 = vmatpush1.msra.mxu0 0.0
          %592 = vmatprep.subr.mxu0 0.0
          %593 = vmatpush1.msra.mxu0 0.0
          %594 = vmatprep.subr.mxu0 0.0
          %595 = vmatpush1.msra.mxu0 0.0
          %596 = vmatprep.subr.mxu0 0.0
          %597 = vmatpush1.msra.mxu0 0.0
          %598 = vmatprep.subr.mxu0 0.0
          %599 = vmatpush1.msra.mxu0 0.0
          %600 = vmatprep.subr.mxu0 0.0
          %601 = vmatpush1.msra.mxu0 0.0
          %602 = vmatprep.subr.mxu0 0.0
          %603 = vmatpush1.msra.mxu0 0.0
          %604 = vmatprep.subr.mxu0 0.0
          %605 = vmatpush1.msra.mxu0 0.0
          %606 = vmatprep.subr.mxu0 0.0
          %607 = vmatpush1.msra.mxu0 0.0
          %608 = vmatprep.subr.mxu0 0.0
          %609 = vmatpush1.msra.mxu0 0.0
          %610 = vmatprep.subr.mxu0 0.0
          %611 = vmatpush1.msra.mxu0 0.0
          %612 = vmatprep.subr.mxu0 0.0
          %613 = vmatpush1.msra.mxu0 0.0
          %614 = vmatprep.subr.mxu0 0.0
          %615 = vmatpush1.msra.mxu0 0.0
          %616 = vmatprep.subr.mxu0 0.0
          %617 = vmatpush1.msra.mxu0 0.0
          %618 = vmatprep.subr.mxu0 0.0
          %619 = vmatpush1.msra.mxu0 0.0
          %620 = vmatprep.subr.mxu0 0.0
          %621 = vmatpush1.msra.mxu0 0.0
          %622 = vmatprep.subr.mxu0 0.0
          %623 = vmatpush1.msra.mxu0 0.0
          %624 = vmatprep.mubr.f32.mxu0 0.0
          %625 = vmatmul.mubr.f32.gmra.mrb[0].mxu0 %v554
          %v626 = vpop.f32.mrb[0].mxu0
          %v627 = vadd.f32 0.0, %v626
          %v628 = vpop.f32.mrb[0].mxu0
          %629 = vdwg.mxu0
          %v630 = vld [vmem:[%s3] sm:$0xff]
          %v631 = vld [vmem:[%s3 + $0x8] sm:$0xff]
          %v632 = vld [vmem:[%s3 + $0x10] sm:$0xff]
          %v633 = vld [vmem:[%s3 + $0x18] sm:$0xff]
          %v634 = vld [vmem:[#allocation7] sm:$0xff]
          %v635 = vld [vmem:[#allocation7 + $0x8] sm:$0xff]
          %v636 = vld [vmem:[#allocation7 + $0x10] sm:$0xff]
          %v637 = vld [vmem:[#allocation7 + $0x18] sm:$0xff]
          %v639 = vrot.slane %v627, 1
          %v640 = vsel %vm476, %v639, 0
          %642 = vmatprep.subr.mxu0 0.0
          %643 = vmatpush1.msra.mxu0 %v634
          %644 = vmatprep.subr.mxu0 0.0
          %645 = vmatpush1.msra.mxu0 %v635
          %646 = vmatprep.subr.mxu0 0.0
          %647 = vmatpush1.msra.mxu0 %v636
          %648 = vmatprep.subr.mxu0 0.0
          %649 = vmatpush1.msra.mxu0 %v637
          %650 = vmatprep.subr.mxu0 0.0
          %651 = vmatpush1.msra.mxu0 0.0
          %652 = vmatprep.subr.mxu0 0.0
          %653 = vmatpush1.msra.mxu0 0.0
          %654 = vmatprep.subr.mxu0 0.0
          %655 = vmatpush1.msra.mxu0 0.0
          %656 = vmatprep.subr.mxu0 0.0
          %657 = vmatpush1.msra.mxu0 0.0
          %658 = vmatprep.subr.mxu0 0.0
          %659 = vmatpush1.msra.mxu0 0.0
          %660 = vmatprep.subr.mxu0 0.0
          %661 = vmatpush1.msra.mxu0 0.0
          %662 = vmatprep.subr.mxu0 0.0
          %663 = vmatpush1.msra.mxu0 0.0
          %664 = vmatprep.subr.mxu0 0.0
          %665 = vmatpush1.msra.mxu0 0.0
          %666 = vmatprep.subr.mxu0 0.0
          %667 = vmatpush1.msra.mxu0 0.0
          %668 = vmatprep.subr.mxu0 0.0
          %669 = vmatpush1.msra.mxu0 0.0
          %670 = vmatprep.subr.mxu0 0.0
          %671 = vmatpush1.msra.mxu0 0.0
          %672 = vmatprep.subr.mxu0 0.0
          %673 = vmatpush1.msra.mxu0 0.0
          %674 = vmatprep.subr.mxu0 0.0
          %675 = vmatpush1.msra.mxu0 0.0
          %676 = vmatprep.subr.mxu0 0.0
          %677 = vmatpush1.msra.mxu0 0.0
          %678 = vmatprep.subr.mxu0 0.0
          %679 = vmatpush1.msra.mxu0 0.0
          %680 = vmatprep.subr.mxu0 0.0
          %681 = vmatpush1.msra.mxu0 0.0
          %682 = vmatprep.subr.mxu0 0.0
          %683 = vmatpush1.msra.mxu0 0.0
          %684 = vmatprep.subr.mxu0 0.0
          %685 = vmatpush1.msra.mxu0 0.0
          %686 = vmatprep.subr.mxu0 0.0
          %687 = vmatpush1.msra.mxu0 0.0
          %688 = vmatprep.subr.mxu0 0.0
          %689 = vmatpush1.msra.mxu0 0.0
          %690 = vmatprep.subr.mxu0 0.0
          %691 = vmatpush1.msra.mxu0 0.0
          %692 = vmatprep.subr.mxu0 0.0
          %693 = vmatpush1.msra.mxu0 0.0
          %694 = vmatprep.subr.mxu0 0.0
          %695 = vmatpush1.msra.mxu0 0.0
          %696 = vmatprep.subr.mxu0 0.0
          %697 = vmatpush1.msra.mxu0 0.0
          %698 = vmatprep.subr.mxu0 0.0
          %699 = vmatpush1.msra.mxu0 0.0
          %700 = vmatprep.subr.mxu0 0.0
          %701 = vmatpush1.msra.mxu0 0.0
          %702 = vmatprep.subr.mxu0 0.0
          %703 = vmatpush1.msra.mxu0 0.0
          %704 = vmatprep.subr.mxu0 0.0
          %705 = vmatpush1.msra.mxu0 0.0
          %706 = vmatprep.mubr.f32.mxu0 0.0
          %707 = vmatmul.mubr.f32.gmra.mrb[0].mxu0 %v640
          %v708 = vpop.f32.mrb[0].mxu0
          %v709 = vadd.f32 0.0, %v708
          %v710 = vpop.f32.mrb[0].mxu0
          %711 = vdwg.mxu0
          %v712 = vsel %vm476, %v627, 0
          %714 = vmatprep.subr.mxu0 0.0
          %715 = vmatpush1.msra.mxu0 %v630
          %716 = vmatprep.subr.mxu0 0.0
          %717 = vmatpush1.msra.mxu0 %v631
          %718 = vmatprep.subr.mxu0 0.0
          %719 = vmatpush1.msra.mxu0 %v632
          %720 = vmatprep.subr.mxu0 0.0
          %721 = vmatpush1.msra.mxu0 %v633
          %722 = vmatprep.subr.mxu0 0.0
          %723 = vmatpush1.msra.mxu0 0.0
          %724 = vmatprep.subr.mxu0 0.0
          %725 = vmatpush1.msra.mxu0 0.0
          %726 = vmatprep.subr.mxu0 0.0
          %727 = vmatpush1.msra.mxu0 0.0
          %728 = vmatprep.subr.mxu0 0.0
          %729 = vmatpush1.msra.mxu0 0.0
          %730 = vmatprep.subr.mxu0 0.0
          %731 = vmatpush1.msra.mxu0 0.0
          %732 = vmatprep.subr.mxu0 0.0
          %733 = vmatpush1.msra.mxu0 0.0
          %734 = vmatprep.subr.mxu0 0.0
          %735 = vmatpush1.msra.mxu0 0.0
          %736 = vmatprep.subr.mxu0 0.0
          %737 = vmatpush1.msra.mxu0 0.0
          %738 = vmatprep.subr.mxu0 0.0
          %739 = vmatpush1.msra.mxu0 0.0
          %740 = vmatprep.subr.mxu0 0.0
          %741 = vmatpush1.msra.mxu0 0.0
          %742 = vmatprep.subr.mxu0 0.0
          %743 = vmatpush1.msra.mxu0 0.0
          %744 = vmatprep.subr.mxu0 0.0
          %745 = vmatpush1.msra.mxu0 0.0
          %746 = vmatprep.subr.mxu0 0.0
          %747 = vmatpush1.msra.mxu0 0.0
          %748 = vmatprep.subr.mxu0 0.0
          %749 = vmatpush1.msra.mxu0 0.0
          %750 = vmatprep.subr.mxu0 0.0
          %751 = vmatpush1.msra.mxu0 0.0
          %752 = vmatprep.subr.mxu0 0.0
          %753 = vmatpush1.msra.mxu0 0.0
          %754 = vmatprep.subr.mxu0 0.0
          %755 = vmatpush1.msra.mxu0 0.0
          %756 = vmatprep.subr.mxu0 0.0
          %757 = vmatpush1.msra.mxu0 0.0
          %758 = vmatprep.subr.mxu0 0.0
          %759 = vmatpush1.msra.mxu0 0.0
          %760 = vmatprep.subr.mxu0 0.0
          %761 = vmatpush1.msra.mxu0 0.0
          %762 = vmatprep.subr.mxu0 0.0
          %763 = vmatpush1.msra.mxu0 0.0
          %764 = vmatprep.subr.mxu0 0.0
          %765 = vmatpush1.msra.mxu0 0.0
          %766 = vmatprep.subr.mxu0 0.0
          %767 = vmatpush1.msra.mxu0 0.0
          %768 = vmatprep.subr.mxu0 0.0
          %769 = vmatpush1.msra.mxu0 0.0
          %770 = vmatprep.subr.mxu0 0.0
          %771 = vmatpush1.msra.mxu0 0.0
          %772 = vmatprep.subr.mxu0 0.0
          %773 = vmatpush1.msra.mxu0 0.0
          %774 = vmatprep.subr.mxu0 0.0
          %775 = vmatpush1.msra.mxu0 0.0
          %776 = vmatprep.subr.mxu0 0.0
          %777 = vmatpush1.msra.mxu0 0.0
          %778 = vmatprep.mubr.f32.mxu0 0.0
          %779 = vmatmul.mubr.f32.gmra.mrb[0].mxu0 %v712
          %v780 = vpop.f32.mrb[0].mxu0
          %v781 = vadd.f32 %v709, %v780
          %v782 = vpop.f32.mrb[0].mxu0
          %783 = vdwg.mxu0
          %v784 = vld [vmem:[%s5] sm:$0x1]
          %v785 = vadd.f32 %v781, %v784
          %v786 = vxor.u32 %v785, 2147483648
          %v787 = vmul.f32 %v786, 1.442695
          %v788 = vpow.pop %v787
          %v789 = vadd.f32 %v788, 1.0
          %v790 = vrcp.pop %v789
          %v791 = vmul.f32 1.0, %v790
          %vm792 = vcmask 253952
          %793 = vst.msk [vmem:[%s299] sm:$0x1] %vm792, %v791
        $region64: #{tpu_custom_call.1} parent=43 // pred_fallthru
          _
        %s794 = sand.u32 %s177, 1
        %s795 = scalar_lea.sflag [#allocation6], %s794
        %s796 = sand.u32 %s177, 1
        %s797 = scalar_lea.vmem [#allocation9], %s796
        // Predicated region
        $region65: #{tpu_custom_call.1} parent=43 // pred_check
          %p798 = pneg %p187
        $region66: #{tpu_custom_call.1} parent=43 // pred_check_branch
          %800 = sbr.rel (%p798) target = $region68
        $region67: #{tpu_custom_call.1} parent=43 // pred_region
          %s802 = ssub.s32 16, 16
          %803 = vsyncadd %s795, %s802
          %s804 = smul.addr %s28, 16
          %s805 = scalar_lea.hbm %s6, %s804
          %s807 = sshll.u32 %s797, 4
          %s808 = int_to_ptr.vmem [resolvable:$true] %s807
          %810 = dma.vmem_to_hbm [thread:$0]  %s808, 16, %s805, %s795
        $region68: #{tpu_custom_call.1} parent=43 // pred_fallthru
          _
      $region44: #{tpu_custom_call.1} parent=5 // pred_fallthru
        _
      %p811 = scmp.le.s32.totalorder 2, %s19
      // Predicated region
      $region69: #{tpu_custom_call.1} parent=5 // pred_check
        %p812 = pneg %p811
      $region70: #{tpu_custom_call.1} parent=5 // pred_check_branch
        %814 = sbr.rel (%p812) target = $region72
      $region71: #{tpu_custom_call.1} parent=5 // pred_region
        %s815 = ssub.s32 %s19, 2
        // Predicated region
        $region73: #{tpu_custom_call.1} parent=71 // pred_check
          %p816 = pneg %p193
        $region74: #{tpu_custom_call.1} parent=71 // pred_check_branch
          %818 = sbr.rel (%p816) target = $region76
        $region75: #{tpu_custom_call.1} parent=71 // pred_region
          %s819 = sand.u32 %s178, 1
          %s820 = scalar_lea.sflag [#allocation6], %s819
          %s821 = sand.u32 %s178, 1
          %s822 = scalar_lea.vmem [#allocation9], %s821
          %823 = dma.done %s820, 16
        $region76: #{tpu_custom_call.1} parent=71 // pred_fallthru
          _
      $region72: #{tpu_custom_call.1} parent=5 // pred_fallthru
        _
    $region6: #{tpu_custom_call.1} parent=1 // loop_footer
      %s23 = sadd.s32 1, %s19
    $region7: #{tpu_custom_call.1} parent=1 // loop_footer_branch
      %18 = sbr.rel target = $region3
    $region8: #{tpu_custom_call.1} parent=1 // loop_exit
      _
    %824 = vsyncpa [#allocation5], 1
    %s825 = scalar_lea.sflag [#allocation5], 1
    %826 = vsyncpa %s825, 1
    %827 = vsyncpa [#allocation8], 1
    %828 = vsyncpa [#allocation6], 1
    %s829 = scalar_lea.sflag [#allocation6], 1
    %830 = vsyncpa %s829, 1

</llo_original>
